<compile_context>
chip_gen: v7x
topology: tpu7x:2x2x1
jax: 0.10.0
libtpu: 0.0.40
codegen_flags: <defaults>
</compile_context>

<pallas_src>
import math
import functools

import jax
import jax.numpy as jnp
from jax.experimental import pallas as pl
from jax.experimental.pallas import tpu as pltpu


def _round_up(x, m):
    return ((x + m - 1) // m) * m


# -----------------------------------------------------------------------------
# Flash-style sparse-query attention kernel.
#   grid = (B, H, n_kv_tiles); the kv axis is the online-softmax reduction.
#   q_ref   : (1, 1, U, E)   selected queries, pre-scaled by softmax scale
#   k_ref   : (1, 1, TK, E)  one key tile
#   v_ref   : (1, 1, TK, D)  one value tile
#   pos_ref : (1, 1, U, 1)   global sequence position of each selected query
#   o_ref   : (1, 1, U, D)   attended output for the selected queries
# -----------------------------------------------------------------------------
def _sparse_attn_kernel(max_pos_ref,                       # SMEM (B*H,) int32 (scalar prefetch)
                        q_ref, k_ref, v_ref, pos_ref,      # VMEM input blocks
                        o_ref,                             # VMEM output block
                        m_sc, l_sc, acc_sc,                # VMEM scratch
                        *, block_k, n_keys, mask_flag):
    b = pl.program_id(0)
    h = pl.program_id(1)
    kv = pl.program_id(2)

    @pl.when(kv == 0)
    def _init():
        m_sc[...] = jnp.full_like(m_sc, -1e30)   # finite: avoids -inf - -inf NaNs
        l_sc[...] = jnp.zeros_like(l_sc)
        acc_sc[...] = jnp.zeros_like(acc_sc)

    # Causal / padding tile skip: tiles whose first key position is past the
    # largest selected query position are fully masked and contribute nothing
    # (this also skips the zero-padded tail tiles).
    @pl.when(kv * block_k <= max_pos_ref[b * pl.num_programs(1) + h])
    def _step():
        q = q_ref[0, 0]                          # (U, E), already scaled
        k = k_ref[0, 0]                          # (TK, E)
        v = v_ref[0, 0]                          # (TK, D)

        # scores[t, s] = sum_e q[t, e] * k[s, e]; contraction on the last dims
        # of both operands -> MXU directly, no k.T relayout.
        s = jax.lax.dot_general(q, k, (((1,), (1,)), ((), ())),
                                preferred_element_type=jnp.float32)  # (U, TK)

        key_pos = kv * block_k + jax.lax.broadcasted_iota(jnp.int32, s.shape, 1)
        valid = key_pos < n_keys                 # drop zero-padded keys
        if mask_flag:
            # ProbMask: key position must not exceed the query's position.
            valid = jnp.logical_and(valid, key_pos <= pos_ref[0, 0])
        s = jnp.where(valid, s, -1e30)           # finite fill (exp underflows to 0)

        # Online softmax update.
        m_prev = m_sc[...]
        m_new = jnp.maximum(m_prev, jnp.max(s, axis=-1, keepdims=True))
        alpha = jnp.exp(m_prev - m_new)
        p = jnp.exp(s - m_new)
        l_sc[...] = alpha * l_sc[...] + jnp.sum(p, axis=-1, keepdims=True)
        acc_sc[...] = alpha * acc_sc[...] + jnp.dot(
            p.astype(v.dtype), v, preferred_element_type=jnp.float32)
        m_sc[...] = m_new

    @pl.when(kv == pl.num_programs(2) - 1)
    def _finalize():
        # Normalize after the PV matmul: U x D multiplies instead of U x L_K.
        # (approx=True would move the reciprocal to the EUP; with U ~ 32 rows it
        #  is negligible either way, exact keeps the test tolerance tight.)
        o_ref[0, 0] = (acc_sc[...] *
                       pl.reciprocal(l_sc[...], approx=False)).astype(o_ref.dtype)


# -----------------------------------------------------------------------------
# ProbAttention.forward (eval mode).
#   queries: (B, L_Q, H, E)   keys: (B, L_K, H, E)   values: (B, L_K, H, D)
#   Returns (context, None) with context of shape (B, L_Q, H, D).
#   `attn_mask` is ignored: the torch module builds its own ProbMask when
#   mask_flag=True and never reads attn_mask.
# -----------------------------------------------------------------------------
def prob_attention(queries, keys, values, attn_mask=None, *,
                   factor=5, scale=None, mask_flag=True,
                   block_k=512, index_sample=None, sample_key=None):
    B, L_Q, H, E = queries.shape
    _, L_K, _, D = values.shape
    scale = scale if scale is not None else 1.0 / math.sqrt(E)

    U_part = min(factor * int(math.ceil(math.log(L_K))), L_K)
    u = min(factor * int(math.ceil(math.log(L_Q))), L_Q)

    # ---- query-sparsity measurement (plain JAX: data-dependent gather + topk) ----
    if index_sample is None:
        if sample_key is None:
            sample_key = jax.random.PRNGKey(0)
        index_sample = jax.random.randint(sample_key, (L_Q, U_part), 0, L_K)

    k_bhse = jnp.transpose(keys, (0, 2, 1, 3))            # (B, H, L_K, E)
    v_bhsd = jnp.transpose(values, (0, 2, 1, 3))          # (B, H, L_K, D)

    K_sample = k_bhse[:, :, index_sample, :]              # (B, H, L_Q, sample_k, E)
    Q_K_sample = jnp.einsum('blhe,bhlse->bhls', queries, K_sample,
                            precision=jax.lax.Precision.HIGHEST)
    M = jnp.max(Q_K_sample, axis=-1) - jnp.sum(Q_K_sample, axis=-1) / L_K
    _, index = jax.lax.top_k(M, u)                        # (B, H, u) query positions

    b_idx = jnp.arange(B)[:, None, None]
    h_idx = jnp.arange(H)[None, :, None]
    # Gather the selected queries straight from (B, L, H, E) (no full Q transpose)
    # and fold the softmax scale into the same pass.
    q_red = queries[b_idx, index, h_idx, :] * scale       # (B, H, u, E)

    # ---- pad to tile-friendly sizes ----
    u_pad = _round_up(u, 8)
    tk = _round_up(max(8, min(block_k, _round_up(L_K, 8))), 8)
    L_Kp = _round_up(L_K, tk)
    n_kv = L_Kp // tk

    q_red_p = jnp.pad(q_red.astype(queries.dtype),
                      ((0, 0), (0, 0), (0, u_pad - u), (0, 0)))
    pos = index.astype(jnp.int32)                         # (B, H, u)
    pos_p = jnp.pad(pos, ((0, 0), (0, 0), (0, u_pad - u)))[..., None]  # (B,H,u_pad,1)
    k_p = jnp.pad(k_bhse, ((0, 0), (0, 0), (0, L_Kp - L_K), (0, 0)))
    v_p = jnp.pad(v_bhsd, ((0, 0), (0, 0), (0, L_Kp - L_K), (0, 0)))

    if mask_flag:
        max_pos = jnp.max(pos, axis=-1).reshape(B * H).astype(jnp.int32)
    else:
        max_pos = jnp.full((B * H,), L_K - 1, jnp.int32)

    kernel = functools.partial(_sparse_attn_kernel, block_k=tk,
                               n_keys=L_K, mask_flag=mask_flag)

    attn_out = pl.pallas_call(
        kernel,
        out_shape=jax.ShapeDtypeStruct((B, H, u_pad, D), values.dtype),
        grid_spec=pltpu.PrefetchScalarGridSpec(
            num_scalar_prefetch=1,
            grid=(B, H, n_kv),
            in_specs=[
                pl.BlockSpec((1, 1, u_pad, E), lambda b, h, kv, mp: (b, h, 0, 0)),
                pl.BlockSpec((1, 1, tk, E),    lambda b, h, kv, mp: (b, h, kv, 0)),
                pl.BlockSpec((1, 1, tk, D),    lambda b, h, kv, mp: (b, h, kv, 0)),
                pl.BlockSpec((1, 1, u_pad, 1), lambda b, h, kv, mp: (b, h, 0, 0)),
            ],
            out_specs=pl.BlockSpec((1, 1, u_pad, D), lambda b, h, kv, mp: (b, h, 0, 0)),
            scratch_shapes=[
                pltpu.VMEM((u_pad, 1), jnp.float32),   # m (running max)
                pltpu.VMEM((u_pad, 1), jnp.float32),   # l (running denom)
                pltpu.VMEM((u_pad, D), jnp.float32),   # acc (running PV)
            ],
        ),
        compiler_params=pltpu.CompilerParams(
            dimension_semantics=("parallel", "parallel", "arbitrary")),
    )(max_pos, q_red_p, k_p, v_p, pos_p)

    attn_out = attn_out[:, :, :u, :]                      # (B, H, u, D)

    # ---- initial context + scatter of the attended rows (plain JAX) ----
    if mask_flag:
        # Causal path: running cumulative sum of V, built directly in the
        # (B, L, H, D) output layout — no output transpose needed.
        context = jnp.cumsum(values, axis=1)
    else:
        context = jnp.broadcast_to(jnp.mean(values, axis=1, keepdims=True),
                                   (B, L_Q, H, D))
    context = context.at[b_idx, index, h_idx, :].set(attn_out.astype(context.dtype))
    return context, None


# -----------------------------------------------------------------------------
# Pure-JAX reference mirroring the torch module step by step.
# -----------------------------------------------------------------------------
def _reference_prob_attention(queries, keys, values, index_sample, *,
                              factor=5, scale=None, mask_flag=True):
    B, L_Q, H, E = queries.shape
    _, L_K, _, D = values.shape
    scale = scale if scale is not None else 1.0 / math.sqrt(E)
    q = jnp.transpose(queries, (0, 2, 1, 3))
    k = jnp.transpose(keys, (0, 2, 1, 3))
    v = jnp.transpose(values, (0, 2, 1, 3))
    u = min(factor * int(math.ceil(math.log(L_Q))), L_Q)

    K_sample = k[:, :, index_sample, :]
    Q_K_sample = jnp.einsum('bhle,bhlse->bhls', q, K_sample,
                            precision=jax.lax.Precision.HIGHEST)
    M = jnp.max(Q_K_sample, axis=-1) - jnp.sum(Q_K_sample, axis=-1) / L_K
    _, index = jax.lax.top_k(M, u)

    b_idx = jnp.arange(B)[:, None, None]
    h_idx = jnp.arange(H)[None, :, None]
    Q_reduce = q[b_idx, h_idx, index, :]
    scores = jnp.einsum('bhue,bhke->bhuk', Q_reduce, k,
                        precision=jax.lax.Precision.HIGHEST) * scale
    if mask_flag:
        causal = jnp.triu(jnp.ones((L_Q, L_K), dtype=bool), k=1)
        scores = jnp.where(causal[index], -jnp.inf, scores)
        context = jnp.cumsum(v, axis=2)
    else:
        context = jnp.broadcast_to(jnp.mean(v, axis=2, keepdims=True),
                                   (B, H, L_Q, D))
    attn = jax.nn.softmax(scores, axis=-1)
    upd = jnp.einsum('bhuk,bhkd->bhud', attn, v,
                     precision=jax.lax.Precision.HIGHEST)
    context = context.at[b_idx, h_idx, index, :].set(upd.astype(context.dtype))
    return jnp.transpose(context, (0, 2, 1, 3)), None


if __name__ == "__main__":
    B, L, H, E, D = 2, 96, 4, 32, 32          # Informer-like small shapes; u = 25 < L
    factor = 5

    root = jax.random.PRNGKey(0)
    kq, kk, kvv, ks = jax.random.split(root, 4)
    q = jax.random.normal(kq, (B, L, H, E), dtype=jnp.float32)
    k = jax.random.normal(kk, (B, L, H, E), dtype=jnp.float32)
    v = jax.random.normal(kvv, (B, L, H, D), dtype=jnp.float32)

    # Shared random key-sample indices (torch.randint equivalent) so the Pallas
    # path and the reference select from identical samples.
    U_part = min(factor * int(math.ceil(math.log(L))), L)
    index_sample = jax.random.randint(ks, (L, U_part), 0, L)

    out, attn = prob_attention(q, k, v, None, factor=factor,
                               index_sample=index_sample, block_k=64)
    out = jax.block_until_ready(out)

    ref, _ = _reference_prob_attention(q, k, v, index_sample, factor=factor)

    assert attn is None
    assert out.shape == (B, L, H, D)
    assert jnp.allclose(out, ref, atol=1e-3, rtol=1e-3), "mismatch vs reference"
    print("KERNEL_OK")
</pallas_src>

<mosaic_0001>
module attributes {stable_mosaic.version = 11 : i64} {
  func.func @_sparse_attn_kernel(%arg0: i32, %arg1: i32, %arg2: i32, %arg3: memref<8xi32, #tpu.memory_space<smem>>, %arg4: memref<1x1x32x32xf32, #tpu.memory_space<vmem>>, %arg5: memref<1x1x64x32xf32, #tpu.memory_space<vmem>>, %arg6: memref<1x1x64x32xf32, #tpu.memory_space<vmem>>, %arg7: memref<1x1x32x1xi32, #tpu.memory_space<vmem>>, %arg8: memref<1x1x32x32xf32, #tpu.memory_space<vmem>>, %arg9: memref<32x1xf32, #tpu.memory_space<vmem>>, %arg10: memref<32x1xf32, #tpu.memory_space<vmem>>, %arg11: memref<32x32xf32, #tpu.memory_space<vmem>>) attributes {dimension_semantics = [#tpu.dimension_semantics<parallel>, #tpu.dimension_semantics<parallel>, #tpu.dimension_semantics<arbitrary>], iteration_bounds = array<i64: 2, 4, 2>, scalar_prefetch = 1 : i64, scratch_operands = 3 : i64, tpu.core_type = #tpu.core_type<tc>, window_params = [{transform_indices = @transform_0, window_bounds = array<i64: 1, 1, 32, 32>}, {transform_indices = @transform_1, window_bounds = array<i64: 1, 1, 64, 32>}, {transform_indices = @transform_2, window_bounds = array<i64: 1, 1, 64, 32>}, {transform_indices = @transform_3, window_bounds = array<i64: 1, 1, 32, 1>}, {transform_indices = @transform_4, window_bounds = array<i64: 1, 1, 32, 32>}]} {
    %c0_i32 = arith.constant 0 : i32
    %0 = arith.cmpi eq, %arg2, %c0_i32 : i32
    %1 = arith.extui %0 : i1 to i32
    %c0_i32_0 = arith.constant 0 : i32
    %2 = arith.cmpi ne, %1, %c0_i32_0 : i32
    scf.if %2 {
      %cst = arith.constant -1.000000e+30 : f32
      %14 = vector.broadcast %cst : f32 to vector<32x1xf32>
      %c0 = arith.constant 0 : index
      %c0_3 = arith.constant 0 : index
      %15 = vector.load %arg9[%c0, %c0_3] : memref<32x1xf32, #tpu.memory_space<vmem>>, vector<32x1xf32>
      tpu.vector_store %arg9[%c0, %c0_3], %14 {strides = array<i32>} : memref<32x1xf32, #tpu.memory_space<vmem>>, vector<32x1xf32>,
      %cst_4 = arith.constant 0.000000e+00 : f32
      %16 = vector.broadcast %cst_4 : f32 to vector<32x1xf32>
      %c0_5 = arith.constant 0 : index
      %c0_6 = arith.constant 0 : index
      %17 = vector.load %arg10[%c0_5, %c0_6] : memref<32x1xf32, #tpu.memory_space<vmem>>, vector<32x1xf32>
      tpu.vector_store %arg10[%c0_5, %c0_6], %16 {strides = array<i32>} : memref<32x1xf32, #tpu.memory_space<vmem>>, vector<32x1xf32>,
      %cst_7 = arith.constant 0.000000e+00 : f32
      %18 = vector.broadcast %cst_7 : f32 to vector<32x32xf32>
      %c0_8 = arith.constant 0 : index
      %c0_9 = arith.constant 0 : index
      %19 = vector.load %arg11[%c0_8, %c0_9] : memref<32x32xf32, #tpu.memory_space<vmem>>, vector<32x32xf32>
      tpu.vector_store %arg11[%c0_8, %c0_9], %18 {strides = array<i32>} : memref<32x32xf32, #tpu.memory_space<vmem>>, vector<32x32xf32>,
    } else {
    }
    %c64_i32 = arith.constant 64 : i32
    %3 = arith.muli %arg2, %c64_i32 : i32
    %c4_i32 = arith.constant 4 : i32
    %4 = arith.muli %arg0, %c4_i32 : i32
    %5 = arith.addi %4, %arg1 : i32
    %6 = arith.index_cast %5 : i32 to index
    %7 = memref.load %arg3[%6] : memref<8xi32, #tpu.memory_space<smem>>
    %8 = arith.cmpi sle, %3, %7 : i32
    %9 = arith.extui %8 : i1 to i32
    %c0_i32_1 = arith.constant 0 : i32
    %10 = arith.cmpi ne, %9, %c0_i32_1 : i32
    scf.if %10 {
      %c0 = arith.constant 0 : index
      %c0_3 = arith.constant 0 : index
      %c0_4 = arith.constant 0 : index
      %c0_5 = arith.constant 0 : index
      %14 = vector.load %arg4[%c0, %c0_3, %c0_4, %c0_5] : memref<1x1x32x32xf32, #tpu.memory_space<vmem>>, vector<1x1x32x32xf32>
      %15 = vector.shape_cast %14 : vector<1x1x32x32xf32> to vector<32x32xf32>
      %c0_6 = arith.constant 0 : index
      %c0_7 = arith.constant 0 : index
      %c0_8 = arith.constant 0 : index
      %c0_9 = arith.constant 0 : index
      %16 = vector.load %arg5[%c0_6, %c0_7, %c0_8, %c0_9] : memref<1x1x64x32xf32, #tpu.memory_space<vmem>>, vector<1x1x64x32xf32>
      %17 = vector.shape_cast %16 : vector<1x1x64x32xf32> to vector<64x32xf32>
      %c0_10 = arith.constant 0 : index
      %c0_11 = arith.constant 0 : index
      %c0_12 = arith.constant 0 : index
      %c0_13 = arith.constant 0 : index
      %18 = vector.load %arg6[%c0_10, %c0_11, %c0_12, %c0_13] : memref<1x1x64x32xf32, #tpu.memory_space<vmem>>, vector<1x1x64x32xf32>
      %19 = vector.shape_cast %18 : vector<1x1x64x32xf32> to vector<64x32xf32>
      %cst = arith.constant dense<0.000000e+00> : vector<32x64xf32>
      %20 = tpu.matmul %15, %17, %cst {dimension_numbers = #tpu.dot_dimension_numbers<[1], [1], [0], [0], [0, 0, 1, 0], [], []>} : vector<32x32xf32>, vector<64x32xf32>, vector<32x64xf32> -> vector<32x64xf32>
      %c64_i32_14 = arith.constant 64 : i32
      %21 = arith.muli %arg2, %c64_i32_14 : i32
      %22 = tpu.iota {dimensions = array<i32: 1>} : vector<32x64xi32>
      %23 = vector.broadcast %21 : i32 to vector<32x64xi32>
      %24 = arith.addi %23, %22 : vector<32x64xi32>
      %c96_i32 = arith.constant 96 : i32
      %25 = vector.broadcast %c96_i32 : i32 to vector<32x64xi32>
      %26 = arith.cmpi slt, %24, %25 : vector<32x64xi32>
      %c0_15 = arith.constant 0 : index
      %c0_16 = arith.constant 0 : index
      %c0_17 = arith.constant 0 : index
      %c0_18 = arith.constant 0 : index
      %27 = vector.load %arg7[%c0_15, %c0_16, %c0_17, %c0_18] : memref<1x1x32x1xi32, #tpu.memory_space<vmem>>, vector<1x1x32x1xi32>
      %28 = vector.shape_cast %27 : vector<1x1x32x1xi32> to vector<32x1xi32>
      %29 = vector.broadcast %28 : vector<32x1xi32> to vector<32x64xi32>
      %30 = arith.cmpi sle, %24, %29 : vector<32x64xi32>
      %31 = arith.andi %26, %30 : vector<32x64xi1>
      %cst_19 = arith.constant -1.000000e+30 : f32
      %32 = vector.broadcast %cst_19 : f32 to vector<32x64xf32>
      %33 = arith.select %31, %20, %32 : vector<32x64xi1>, vector<32x64xf32>
      %c0_20 = arith.constant 0 : index
      %c0_21 = arith.constant 0 : index
      %34 = vector.load %arg9[%c0_20, %c0_21] : memref<32x1xf32, #tpu.memory_space<vmem>>, vector<32x1xf32>
      %cst_22 = arith.constant dense<0xFF800000> : vector<32xf32>
      %35 = vector.multi_reduction <maximumf>, %33, %cst_22 [1] : vector<32x64xf32> to vector<32xf32>
      %36 = vector.shape_cast %35 : vector<32xf32> to vector<32x1xf32>
      %37 = arith.maximumf %34, %36 : vector<32x1xf32>
      %38 = arith.subf %34, %37 : vector<32x1xf32>
      %39 = math.exp %38 : vector<32x1xf32>
      %40 = vector.broadcast %37 : vector<32x1xf32> to vector<32x64xf32>
      %41 = arith.subf %33, %40 : vector<32x64xf32>
      %42 = math.exp %41 : vector<32x64xf32>
      %c0_23 = arith.constant 0 : index
      %c0_24 = arith.constant 0 : index
      %43 = vector.load %arg10[%c0_23, %c0_24] : memref<32x1xf32, #tpu.memory_space<vmem>>, vector<32x1xf32>
      %44 = arith.mulf %39, %43 : vector<32x1xf32>
      %cst_25 = arith.constant dense<0.000000e+00> : vector<32xf32>
      %45 = vector.multi_reduction <add>, %42, %cst_25 [1] : vector<32x64xf32> to vector<32xf32>
      %46 = vector.shape_cast %45 : vector<32xf32> to vector<32x1xf32>
      %47 = arith.addf %44, %46 : vector<32x1xf32>
      %c0_26 = arith.constant 0 : index
      %c0_27 = arith.constant 0 : index
      %48 = vector.load %arg10[%c0_26, %c0_27] : memref<32x1xf32, #tpu.memory_space<vmem>>, vector<32x1xf32>
      tpu.vector_store %arg10[%c0_26, %c0_27], %47 {strides = array<i32>} : memref<32x1xf32, #tpu.memory_space<vmem>>, vector<32x1xf32>,
      %c0_28 = arith.constant 0 : index
      %c0_29 = arith.constant 0 : index
      %49 = vector.load %arg11[%c0_28, %c0_29] : memref<32x32xf32, #tpu.memory_space<vmem>>, vector<32x32xf32>
      %50 = vector.broadcast %39 : vector<32x1xf32> to vector<32x32xf32>
      %51 = arith.mulf %50, %49 : vector<32x32xf32>
      %cst_30 = arith.constant dense<0.000000e+00> : vector<32x32xf32>
      %52 = tpu.matmul %42, %19, %cst_30 {dimension_numbers = #tpu.dot_dimension_numbers<[1], [0], [0], [1], [0, 0, 1, 1], [], []>} : vector<32x64xf32>, vector<64x32xf32>, vector<32x32xf32> -> vector<32x32xf32>
      %53 = arith.addf %51, %52 : vector<32x32xf32>
      %c0_31 = arith.constant 0 : index
      %c0_32 = arith.constant 0 : index
      %54 = vector.load %arg11[%c0_31, %c0_32] : memref<32x32xf32, #tpu.memory_space<vmem>>, vector<32x32xf32>
      tpu.vector_store %arg11[%c0_31, %c0_32], %53 {strides = array<i32>} : memref<32x32xf32, #tpu.memory_space<vmem>>, vector<32x32xf32>,
      %c0_33 = arith.constant 0 : index
      %c0_34 = arith.constant 0 : index
      %55 = vector.load %arg9[%c0_33, %c0_34] : memref<32x1xf32, #tpu.memory_space<vmem>>, vector<32x1xf32>
      tpu.vector_store %arg9[%c0_33, %c0_34], %37 {strides = array<i32>} : memref<32x1xf32, #tpu.memory_space<vmem>>, vector<32x1xf32>,
    } else {
    }
    %c1_i32 = arith.constant 1 : i32
    %11 = arith.cmpi eq, %arg2, %c1_i32 : i32
    %12 = arith.extui %11 : i1 to i32
    %c0_i32_2 = arith.constant 0 : i32
    %13 = arith.cmpi ne, %12, %c0_i32_2 : i32
    scf.if %13 {
      %c0 = arith.constant 0 : index
      %c0_3 = arith.constant 0 : index
      %14 = vector.load %arg11[%c0, %c0_3] : memref<32x32xf32, #tpu.memory_space<vmem>>, vector<32x32xf32>
      %c0_4 = arith.constant 0 : index
      %c0_5 = arith.constant 0 : index
      %15 = vector.load %arg10[%c0_4, %c0_5] : memref<32x1xf32, #tpu.memory_space<vmem>>, vector<32x1xf32>
      %16 = tpu.reciprocal %15 : vector<32x1xf32> -> vector<32x1xf32>
      %17 = vector.broadcast %16 : vector<32x1xf32> to vector<32x32xf32>
      %18 = arith.mulf %14, %17 : vector<32x32xf32>
      %c0_6 = arith.constant 0 : index
      %c0_7 = arith.constant 0 : index
      %c0_8 = arith.constant 0 : index
      %c0_9 = arith.constant 0 : index
      %19 = vector.load %arg8[%c0_6, %c0_7, %c0_8, %c0_9] : memref<1x1x32x32xf32, #tpu.memory_space<vmem>>, vector<1x1x32x32xf32>
      %20 = vector.shape_cast %19 : vector<1x1x32x32xf32> to vector<32x32xf32>
      %21 = vector.shape_cast %18 : vector<32x32xf32> to vector<1x1x32x32xf32>
      tpu.vector_store %arg8[%c0_6, %c0_7, %c0_8, %c0_9], %21 {strides = array<i32>} : memref<1x1x32x32xf32, #tpu.memory_space<vmem>>, vector<1x1x32x32xf32>,
    } else {
    }
    return
  }
  func.func @transform_0(%arg0: i32, %arg1: i32, %arg2: i32, %arg3: memref<8xi32, #tpu.memory_space<smem>>) -> (i32, i32, i32, i32) {
    %c0_i32 = arith.constant 0 : i32
    %c0_i32_0 = arith.constant 0 : i32
    %c0_i32_1 = arith.constant 0 : i32
    return %arg0, %arg1, %c0_i32, %c0_i32_0 : i32, i32, i32, i32
  }
  func.func @transform_1(%arg0: i32, %arg1: i32, %arg2: i32, %arg3: memref<8xi32, #tpu.memory_space<smem>>) -> (i32, i32, i32, i32) {
    %c0_i32 = arith.constant 0 : i32
    %c0_i32_0 = arith.constant 0 : i32
    return %arg0, %arg1, %arg2, %c0_i32 : i32, i32, i32, i32
  }
  func.func @transform_2(%arg0: i32, %arg1: i32, %arg2: i32, %arg3: memref<8xi32, #tpu.memory_space<smem>>) -> (i32, i32, i32, i32) {
    %c0_i32 = arith.constant 0 : i32
    %c0_i32_0 = arith.constant 0 : i32
    return %arg0, %arg1, %arg2, %c0_i32 : i32, i32, i32, i32
  }
  func.func @transform_3(%arg0: i32, %arg1: i32, %arg2: i32, %arg3: memref<8xi32, #tpu.memory_space<smem>>) -> (i32, i32, i32, i32) {
    %c0_i32 = arith.constant 0 : i32
    %c0_i32_0 = arith.constant 0 : i32
    %c0_i32_1 = arith.constant 0 : i32
    return %arg0, %arg1, %c0_i32, %c0_i32_0 : i32, i32, i32, i32
  }
  func.func @transform_4(%arg0: i32, %arg1: i32, %arg2: i32, %arg3: memref<8xi32, #tpu.memory_space<smem>>) -> (i32, i32, i32, i32) {
    %c0_i32 = arith.constant 0 : i32
    %c0_i32_0 = arith.constant 0 : i32
    %c0_i32_1 = arith.constant 0 : i32
    return %arg0, %arg1, %c0_i32, %c0_i32_0 : i32, i32, i32, i32
  }
}

</mosaic_0001>

<llo_original>
// kernel: tpu_custom_call.1
$region0: #{tpu_custom_call.1}
  #allocation0 [shape = 'u32[]', space=smem, size = 0x4, offset = 0x4, fixed_abs, tag = 'smem constant byte address 0x4 - core index']
  #allocation1 [shape = 'u32[144,128]{1,0:T(1,128)}', space=vmem, size = 0x12000, scoped, tag = 'internal scratch']
  #allocation2 [shape = 'f32[32,1]{1,0:T(8,128)}', space=vmem, size = 0x4000, scoped, tag = 'scratch operand']
  #allocation3 [shape = 'f32[32,1]{1,0:T(8,128)}', space=vmem, size = 0x4000, scoped, tag = 'scratch operand']
  #allocation4 [shape = 'f32[32,32]{1,0:T(8,128)}', space=vmem, size = 0x4000, scoped, tag = 'scratch operand']
  #allocation5 [shape = 's32[1]{0}', space=sflag, size = 0x4, scoped, tag = 'scoped memory for tpu_custom_call.1']
  #allocation6 [shape = 'u8[512]{0}', space=smem, size = 0x200, scoped, tag = 'prefetched SMEM operand 0']
  %s0 = inlined_call_operand.vmem [shape: s32[8], index: 0, kind: input, shape index: {}]
  %s1 = inlined_call_operand.vmem [shape: f32[2,4,32,32], index: 1, kind: input, shape index: {}]
  %s2 = inlined_call_operand.vmem [shape: f32[2,4,128,32], index: 2, kind: input, shape index: {}]
  %s3 = inlined_call_operand.vmem [shape: f32[2,4,128,32], index: 3, kind: input, shape index: {}]
  %s4 = inlined_call_operand.vmem [shape: s32[2,4,32,1], index: 4, kind: input, shape index: {}]
  %s5 = inlined_call_operand.hbm [shape: f32[2,4,32,32], index: 5, kind: output, shape index: {}]
  %s6 = sld [smem:[#allocation0]]
  $region61: #{tpu_custom_call.1} parent=0
    _
  %s8 = ssub.s32 1, %s6
  %s9 = scalar_select 0, %s8, %s6
  %s10 = sshll.u32 %s0, 4
  %s11 = int_to_ptr.vmem [resolvable:$true] %s10
  %13 = dma.vmem_to_smem %s11, 16, [#allocation6], [#allocation5]
  %14 = dma.done [#allocation5], 16
  %15 = sfence
  $region1: #{tpu_custom_call.1} parent=0
    #allocation7 [shape = 'u8[32768]{0}', space=vmem, size = 0x8000, scoped, tag = 'output window, operand 0']
    #allocation8 [shape = 's32[2]{0}', space=sflag, size = 0x8, scoped, tag = 'scoped memory for tpu_custom_call.1']
    %16 = vsyncpa [#allocation8], 0
    %s17 = scalar_lea.sflag [#allocation8], 1
    %18 = vsyncpa %s17, 0
    loop: start=0, step=1, limit=18
    $region2: #{tpu_custom_call.1} parent=1 // loop_pre_header
      _
    $region3: #{tpu_custom_call.1} parent=1 // loop_header
      %s20 = sphi 0, %s24
      %p21 = scmp.ge.s32.totalorder %s20, 18
      %s27 = sphi 0, %s46
      %s28 = sphi 0, %s42
      %s29 = sphi 0, %s38
      %s30 = sphi 0, %s27
      %s31 = sphi 0, %s28
      %s32 = sphi 0, %s29
      %s33 = sphi 0, %s30
      %s34 = sphi 0, %s31
      %s35 = sphi 0, %s32
      %s51 = sphi 0, %s53
      %s54 = sphi 0, %s51
      %s55 = sphi 0, %s54
      %s71 = sphi 0, %s55
      %s81 = sphi 0, %s83
      %s84 = sphi 0, %s81
      %s85 = sphi 0, %s84
      %s101 = sphi 0, %s85
      %s111 = sphi 0, %s113
      %s114 = sphi 0, %s111
      %s115 = sphi 0, %s114
      %s131 = sphi 0, %s115
      %s139 = sphi 0, %s141
      %s142 = sphi 0, %s139
      %s143 = sphi 0, %s142
      %s159 = sphi 0, %s143
      %s167 = sphi 0, %s169
      %s170 = sphi 0, %s167
      %s171 = sphi 0, %s170
      %s187 = sphi 0, %s171
    $region4: #{tpu_custom_call.1} parent=1 // loop_header_branch
      %23 = sbr.rel (%p21) target = $region8
    $region5: #{tpu_custom_call.1} parent=1 // loop_body
      %s25 = ssub.s32 %s20, 1
      %s26 = ssub.s32 %s20, 2
      %s36 = sadd.s32 1, %s29
      %p37 = scmp.ge.s32.totalorder %s36, 2
      %s38 = scalar_select %p37, 0, %s36
      %s39 = sadd.s32 1, %s28
      %s40 = scalar_select %p37, %s39, %s28
      %p41 = scmp.ge.s32.totalorder %s40, 4
      %s42 = scalar_select %p41, 0, %s40
      %s43 = sadd.s32 1, %s27
      %s44 = scalar_select %p41, %s43, %s27
      %p45 = scmp.ge.s32.totalorder %s44, 2
      %s46 = scalar_select %p45, 0, %s44
      %s47 = ssub.s32 %s27, %s46
      %s48 = ssub.s32 %s28, %s42
      %s49 = sor.u32 %s47, %s48
      %p50 = scmp.eq.s32.totalorder %s49, 0
      %s52 = sadd.s32 %s51, 1
      %s53 = scalar_select %p50, %s51, %s52
      %p56 = pneg %p50
      %p57 = scmp.eq.s32.totalorder %s20, 15
      %p58 = por %p56, %p57
      %p59 = scmp.ne.s32.totalorder %s51, %s54
      %p60 = scmp.eq.s32.totalorder %s20, 0
      %p61 = por %p59, %p60
      %p62 = scmp.ne.s32.totalorder %s51, %s54
      %p63 = scmp.eq.s32.totalorder %s25, 15
      %p64 = por %p62, %p63
      %p65 = scmp.ne.s32.totalorder %s54, %s55
      %p66 = scmp.eq.s32.totalorder %s25, 0
      %p67 = por %p65, %p66
      %p68 = scmp.ne.s32.totalorder %s54, %s55
      %p69 = scmp.eq.s32.totalorder %s26, 15
      %p70 = por %p68, %p69
      %p72 = scmp.ne.s32.totalorder %s55, %s71
      %p73 = scmp.eq.s32.totalorder %s26, 0
      %p74 = por %p72, %p73
      %s75 = ssub.s32 %s27, %s46
      %s76 = ssub.s32 %s28, %s42
      %s77 = sor.u32 %s75, %s76
      %s78 = ssub.s32 %s29, %s38
      %s79 = sor.u32 %s77, %s78
      %p80 = scmp.eq.s32.totalorder %s79, 0
      %s82 = sadd.s32 %s81, 1
      %s83 = scalar_select %p80, %s81, %s82
      %p86 = pneg %p80
      %p87 = scmp.eq.s32.totalorder %s20, 15
      %p88 = por %p86, %p87
      %p89 = scmp.ne.s32.totalorder %s81, %s84
      %p90 = scmp.eq.s32.totalorder %s20, 0
      %p91 = por %p89, %p90
      %p92 = scmp.ne.s32.totalorder %s81, %s84
      %p93 = scmp.eq.s32.totalorder %s25, 15
      %p94 = por %p92, %p93
      %p95 = scmp.ne.s32.totalorder %s84, %s85
      %p96 = scmp.eq.s32.totalorder %s25, 0
      %p97 = por %p95, %p96
      %p98 = scmp.ne.s32.totalorder %s84, %s85
      %p99 = scmp.eq.s32.totalorder %s26, 15
      %p100 = por %p98, %p99
      %p102 = scmp.ne.s32.totalorder %s85, %s101
      %p103 = scmp.eq.s32.totalorder %s26, 0
      %p104 = por %p102, %p103
      %s105 = ssub.s32 %s27, %s46
      %s106 = ssub.s32 %s28, %s42
      %s107 = sor.u32 %s105, %s106
      %s108 = ssub.s32 %s29, %s38
      %s109 = sor.u32 %s107, %s108
      %p110 = scmp.eq.s32.totalorder %s109, 0
      %s112 = sadd.s32 %s111, 1
      %s113 = scalar_select %p110, %s111, %s112
      %p116 = pneg %p110
      %p117 = scmp.eq.s32.totalorder %s20, 15
      %p118 = por %p116, %p117
      %p119 = scmp.ne.s32.totalorder %s111, %s114
      %p120 = scmp.eq.s32.totalorder %s20, 0
      %p121 = por %p119, %p120
      %p122 = scmp.ne.s32.totalorder %s111, %s114
      %p123 = scmp.eq.s32.totalorder %s25, 15
      %p124 = por %p122, %p123
      %p125 = scmp.ne.s32.totalorder %s114, %s115
      %p126 = scmp.eq.s32.totalorder %s25, 0
      %p127 = por %p125, %p126
      %p128 = scmp.ne.s32.totalorder %s114, %s115
      %p129 = scmp.eq.s32.totalorder %s26, 15
      %p130 = por %p128, %p129
      %p132 = scmp.ne.s32.totalorder %s115, %s131
      %p133 = scmp.eq.s32.totalorder %s26, 0
      %p134 = por %p132, %p133
      %s135 = ssub.s32 %s27, %s46
      %s136 = ssub.s32 %s28, %s42
      %s137 = sor.u32 %s135, %s136
      %p138 = scmp.eq.s32.totalorder %s137, 0
      %s140 = sadd.s32 %s139, 1
      %s141 = scalar_select %p138, %s139, %s140
      %p144 = pneg %p138
      %p145 = scmp.eq.s32.totalorder %s20, 15
      %p146 = por %p144, %p145
      %p147 = scmp.ne.s32.totalorder %s139, %s142
      %p148 = scmp.eq.s32.totalorder %s20, 0
      %p149 = por %p147, %p148
      %p150 = scmp.ne.s32.totalorder %s139, %s142
      %p151 = scmp.eq.s32.totalorder %s25, 15
      %p152 = por %p150, %p151
      %p153 = scmp.ne.s32.totalorder %s142, %s143
      %p154 = scmp.eq.s32.totalorder %s25, 0
      %p155 = por %p153, %p154
      %p156 = scmp.ne.s32.totalorder %s142, %s143
      %p157 = scmp.eq.s32.totalorder %s26, 15
      %p158 = por %p156, %p157
      %p160 = scmp.ne.s32.totalorder %s143, %s159
      %p161 = scmp.eq.s32.totalorder %s26, 0
      %p162 = por %p160, %p161
      %s163 = ssub.s32 %s27, %s46
      %s164 = ssub.s32 %s28, %s42
      %s165 = sor.u32 %s163, %s164
      %p166 = scmp.eq.s32.totalorder %s165, 0
      %s168 = sadd.s32 %s167, 1
      %s169 = scalar_select %p166, %s167, %s168
      %p172 = pneg %p166
      %p173 = scmp.eq.s32.totalorder %s20, 15
      %p174 = por %p172, %p173
      %p175 = scmp.ne.s32.totalorder %s167, %s170
      %p176 = scmp.eq.s32.totalorder %s20, 0
      %p177 = por %p175, %p176
      %p178 = scmp.ne.s32.totalorder %s167, %s170
      %p179 = scmp.eq.s32.totalorder %s25, 15
      %p180 = por %p178, %p179
      %p181 = scmp.ne.s32.totalorder %s170, %s171
      %p182 = scmp.eq.s32.totalorder %s25, 0
      %p183 = por %p181, %p182
      %p184 = scmp.ne.s32.totalorder %s170, %s171
      %p185 = scmp.eq.s32.totalorder %s26, 15
      %p186 = por %p184, %p185
      %p188 = scmp.ne.s32.totalorder %s171, %s187
      %p189 = scmp.eq.s32.totalorder %s26, 0
      %p190 = por %p188, %p189
      %p191 = scmp.le.s32.totalorder 1, %s20
      %p192 = scmp.lt.s32.totalorder %s20, 17
      %p193 = pnand %p191, %p192
      %p194 = pneg %p193
      // Predicated region
      $region9: #{tpu_custom_call.1} parent=5 // pred_check
        _
      $region10: #{tpu_custom_call.1} parent=5 // pred_check_branch
        %196 = sbr.rel (%p193) target = $region12
      $region11: #{tpu_custom_call.1} parent=5 // pred_region
        %s197 = ssub.s32 %s20, 1
      $region12: #{tpu_custom_call.1} parent=5 // pred_fallthru
        _
      %p198 = scmp.lt.s32.totalorder %s20, 16
      // Predicated region
      $region13: #{tpu_custom_call.1} parent=5 // pred_check
        %p199 = pneg %p198
      $region14: #{tpu_custom_call.1} parent=5 // pred_check_branch
        %201 = sbr.rel (%p199) target = $region16
      $region15: #{tpu_custom_call.1} parent=5 // pred_region
        // Predicated region
        $region17: #{tpu_custom_call.1} parent=15 // pred_check
          %p202 = pneg %p61
        $region18: #{tpu_custom_call.1} parent=15 // pred_check_branch
          %204 = sbr.rel (%p202) target = $region20
        $region19: #{tpu_custom_call.1} parent=15 // pred_region
          %p205 = scmp.lt.s32.totalorder %s27, 1
          %s206 = scalar_select %p205, %s27, 1
          %p207 = scmp.lt.s32.totalorder %s28, 3
          %s208 = scalar_select %p207, %s28, 3
          %s209 = smul.addr %s208, 4
          %s210 = smul.addr %s206, 16
          %s211 = sadd.s32 %s209, %s210
          %s212 = smul.addr %s211, 8
          %s213 = scalar_lea.vmem %s1, %s212
        $region20: #{tpu_custom_call.1} parent=15 // pred_fallthru
          _
        // Predicated region
        $region21: #{tpu_custom_call.1} parent=15 // pred_check
          %p214 = pneg %p91
        $region22: #{tpu_custom_call.1} parent=15 // pred_check_branch
          %216 = sbr.rel (%p214) target = $region24
        $region23: #{tpu_custom_call.1} parent=15 // pred_region
          %s217 = smul.u32 8, %s29
          %p218 = scmp.lt.s32.totalorder %s27, 1
          %s219 = scalar_select %p218, %s27, 1
          %p220 = scmp.lt.s32.totalorder %s28, 3
          %s221 = scalar_select %p220, %s28, 3
          %p222 = scmp.lt.s32.totalorder %s217, 15
          %s223 = scalar_select %p222, %s217, 15
          %s224 = smul.addr %s221, 16
          %s225 = sadd.s32 %s223, %s224
          %s226 = smul.addr %s219, 64
          %s227 = sadd.s32 %s225, %s226
          %s228 = smul.addr %s227, 8
          %s229 = scalar_lea.vmem %s2, %s228
          %s230 = smul.u32 8, %s29
        $region24: #{tpu_custom_call.1} parent=15 // pred_fallthru
          _
        // Predicated region
        $region25: #{tpu_custom_call.1} parent=15 // pred_check
          %p231 = pneg %p121
        $region26: #{tpu_custom_call.1} parent=15 // pred_check_branch
          %233 = sbr.rel (%p231) target = $region28
        $region27: #{tpu_custom_call.1} parent=15 // pred_region
          %s234 = smul.u32 8, %s29
          %p235 = scmp.lt.s32.totalorder %s27, 1
          %s236 = scalar_select %p235, %s27, 1
          %p237 = scmp.lt.s32.totalorder %s28, 3
          %s238 = scalar_select %p237, %s28, 3
          %p239 = scmp.lt.s32.totalorder %s234, 15
          %s240 = scalar_select %p239, %s234, 15
          %s241 = smul.addr %s238, 16
          %s242 = sadd.s32 %s240, %s241
          %s243 = smul.addr %s236, 64
          %s244 = sadd.s32 %s242, %s243
          %s245 = smul.addr %s244, 8
          %s246 = scalar_lea.vmem %s3, %s245
          %s247 = smul.u32 8, %s29
        $region28: #{tpu_custom_call.1} parent=15 // pred_fallthru
          _
        // Predicated region
        $region29: #{tpu_custom_call.1} parent=15 // pred_check
          %p248 = pneg %p149
        $region30: #{tpu_custom_call.1} parent=15 // pred_check_branch
          %250 = sbr.rel (%p248) target = $region32
        $region31: #{tpu_custom_call.1} parent=15 // pred_region
          %p251 = scmp.lt.s32.totalorder %s27, 1
          %s252 = scalar_select %p251, %s27, 1
          %p253 = scmp.lt.s32.totalorder %s28, 3
          %s254 = scalar_select %p253, %s28, 3
          %s255 = smul.addr %s254, 4
          %s256 = smul.addr %s252, 16
          %s257 = sadd.s32 %s255, %s256
          %s258 = smul.addr %s257, 8
          %s259 = scalar_lea.vmem %s4, %s258
        $region32: #{tpu_custom_call.1} parent=15 // pred_fallthru
          _
      $region16: #{tpu_custom_call.1} parent=5 // pred_fallthru
        _
      %p260 = scmp.le.s32.totalorder 1, %s20
      %p261 = scmp.lt.s32.totalorder %s20, 17
      %p262 = pnand %p260, %p261
      %p263 = pneg %p262
      // Predicated region
      $region33: #{tpu_custom_call.1} parent=5 // pred_check
        _
      $region34: #{tpu_custom_call.1} parent=5 // pred_check_branch
        %265 = sbr.rel (%p262) target = $region36
      $region35: #{tpu_custom_call.1} parent=5 // pred_region
        %s266 = ssub.s32 %s20, 1
        %p267 = scmp.lt.s32.totalorder %s30, 1
        %s268 = scalar_select %p267, %s30, 1
        %p269 = scmp.lt.s32.totalorder %s31, 3
        %s270 = scalar_select %p269, %s31, 3
        %s271 = smul.addr %s270, 4
        %s272 = smul.addr %s268, 16
        %s273 = sadd.s32 %s271, %s272
        %s274 = smul.addr %s273, 8
        %s275 = scalar_lea.vmem %s1, %s274
        %p276 = pneg %p67
        %p277 = pneg %p64
        %s278 = smul.u32 8, %s32
        %p279 = scmp.lt.s32.totalorder %s30, 1
        %s280 = scalar_select %p279, %s30, 1
        %p281 = scmp.lt.s32.totalorder %s31, 3
        %s282 = scalar_select %p281, %s31, 3
        %p283 = scmp.lt.s32.totalorder %s278, 15
        %s284 = scalar_select %p283, %s278, 15
        %s285 = smul.addr %s282, 16
        %s286 = sadd.s32 %s284, %s285
        %s287 = smul.addr %s280, 64
        %s288 = sadd.s32 %s286, %s287
        %s289 = smul.addr %s288, 8
        %s290 = scalar_lea.vmem %s2, %s289
        %p291 = pneg %p97
        %p292 = pneg %p94
        %s293 = smul.u32 8, %s32
        %p294 = scmp.lt.s32.totalorder %s30, 1
        %s295 = scalar_select %p294, %s30, 1
        %p296 = scmp.lt.s32.totalorder %s31, 3
        %s297 = scalar_select %p296, %s31, 3
        %p298 = scmp.lt.s32.totalorder %s293, 15
        %s299 = scalar_select %p298, %s293, 15
        %s300 = smul.addr %s297, 16
        %s301 = sadd.s32 %s299, %s300
        %s302 = smul.addr %s295, 64
        %s303 = sadd.s32 %s301, %s302
        %s304 = smul.addr %s303, 8
        %s305 = scalar_lea.vmem %s3, %s304
        %p306 = pneg %p127
        %p307 = pneg %p124
        %p308 = scmp.lt.s32.totalorder %s30, 1
        %s309 = scalar_select %p308, %s30, 1
        %p310 = scmp.lt.s32.totalorder %s31, 3
        %s311 = scalar_select %p310, %s31, 3
        %s312 = smul.addr %s311, 4
        %s313 = smul.addr %s309, 16
        %s314 = sadd.s32 %s312, %s313
        %s315 = smul.addr %s314, 8
        %s316 = scalar_lea.vmem %s4, %s315
        %p317 = pneg %p155
        %p318 = pneg %p152
        %p319 = pneg %p183
        %p320 = pneg %p180
        %s321 = sand.u32 %s170, 1
        %s322 = scalar_lea.sflag [#allocation8], %s321
        %s323 = sand.u32 %s170, 1
        %s324 = smul.addr %s323, 32
        %s325 = scalar_lea.vmem [#allocation7], %s324
        %p326 = scmp.lt.s32.totalorder %s30, 1
        %s327 = scalar_select %p326, %s30, 1
        %p328 = scmp.lt.s32.totalorder %s31, 3
        %s329 = scalar_select %p328, %s31, 3
        %s330 = smul.addr %s329, 4
        %s331 = smul.addr %s327, 16
        %s332 = sadd.s32 %s330, %s331
        %s333 = smul.addr %s332, 8
        %s334 = scalar_lea.vmem %s1, %s333
        %s335 = smul.u32 8, %s32
        %p336 = scmp.lt.s32.totalorder %s30, 1
        %s337 = scalar_select %p336, %s30, 1
        %p338 = scmp.lt.s32.totalorder %s31, 3
        %s339 = scalar_select %p338, %s31, 3
        %p340 = scmp.lt.s32.totalorder %s335, 15
        %s341 = scalar_select %p340, %s335, 15
        %s342 = smul.addr %s339, 16
        %s343 = sadd.s32 %s341, %s342
        %s344 = smul.addr %s337, 64
        %s345 = sadd.s32 %s343, %s344
        %s346 = smul.addr %s345, 8
        %s347 = scalar_lea.vmem %s2, %s346
        %s348 = smul.u32 8, %s32
        %s349 = smul.u32 8, %s32
        %p350 = scmp.lt.s32.totalorder %s30, 1
        %s351 = scalar_select %p350, %s30, 1
        %p352 = scmp.lt.s32.totalorder %s31, 3
        %s353 = scalar_select %p352, %s31, 3
        %p354 = scmp.lt.s32.totalorder %s349, 15
        %s355 = scalar_select %p354, %s349, 15
        %s356 = smul.addr %s353, 16
        %s357 = sadd.s32 %s355, %s356
        %s358 = smul.addr %s351, 64
        %s359 = sadd.s32 %s357, %s358
        %s360 = smul.addr %s359, 8
        %s361 = scalar_lea.vmem %s3, %s360
        %s362 = smul.u32 8, %s32
        %p363 = scmp.lt.s32.totalorder %s30, 1
        %s364 = scalar_select %p363, %s30, 1
        %p365 = scmp.lt.s32.totalorder %s31, 3
        %s366 = scalar_select %p365, %s31, 3
        %s367 = smul.addr %s366, 4
        %s368 = smul.addr %s364, 16
        %s369 = sadd.s32 %s367, %s368
        %s370 = smul.addr %s369, 8
        %s371 = scalar_lea.vmem %s4, %s370
        %p372 = scmp.eq.s32.totalorder %s32, 0
        // Predicated region
        $region37: #{tpu_custom_call.1} parent=35 // pred_check
          %p373 = pneg %p372
        $region38: #{tpu_custom_call.1} parent=35 // pred_check_branch
          %375 = sbr.rel (%p373) target = $region40
        $region39: #{tpu_custom_call.1} parent=35 // pred_region
          %vm376 = vcmask 7168
          %377 = vst.msk [vmem:[#allocation2] sm:$0xff] %vm376, -1e+30
          %378 = vst.msk [vmem:[#allocation2 + $0x8] sm:$0xff] %vm376, -1e+30
          %379 = vst.msk [vmem:[#allocation2 + $0x10] sm:$0xff] %vm376, -1e+30
          %380 = vst.msk [vmem:[#allocation2 + $0x18] sm:$0xff] %vm376, -1e+30
          %381 = vst.msk [vmem:[#allocation3] sm:$0xff] %vm376, 0.0
          %382 = vst.msk [vmem:[#allocation3 + $0x8] sm:$0xff] %vm376, 0.0
          %383 = vst.msk [vmem:[#allocation3 + $0x10] sm:$0xff] %vm376, 0.0
          %384 = vst.msk [vmem:[#allocation3 + $0x18] sm:$0xff] %vm376, 0.0
          %vm385 = vcmask 261120
          %386 = vst.msk [vmem:[#allocation4] sm:$0xff] %vm385, 0.0
          %387 = vst.msk [vmem:[#allocation4 + $0x8] sm:$0xff] %vm385, 0.0
          %388 = vst.msk [vmem:[#allocation4 + $0x10] sm:$0xff] %vm385, 0.0
          %389 = vst.msk [vmem:[#allocation4 + $0x18] sm:$0xff] %vm385, 0.0
        $region40: #{tpu_custom_call.1} parent=35 // pred_fallthru
          _
        %s390 = smul.u32 %s32, 64
        %s391 = smul.u32 %s30, 4
        %s392 = sadd.s32 %s391, %s31
        %s393 = sld [smem:[#allocation6 + %s392]]
        %p394 = scmp.le.s32.totalorder %s390, %s393
        // Predicated region
        $region41: #{tpu_custom_call.1} parent=35 // pred_check
          %p395 = pneg %p394
        $region42: #{tpu_custom_call.1} parent=35 // pred_check_branch
          %397 = sbr.rel (%p395) target = $region44
        $region43: #{tpu_custom_call.1} parent=35 // pred_region
          %v398 = vld [vmem:[%s334] sm:$0xff]
          %v399 = vld [vmem:[%s334 + $0x8] sm:$0xff]
          %v400 = vld [vmem:[%s334 + $0x10] sm:$0xff]
          %v401 = vld [vmem:[%s334 + $0x18] sm:$0xff]
          %v402 = vld [vmem:[%s347] sm:$0xff]
          %v403 = vld [vmem:[%s347 + $0x8] sm:$0xff]
          %v404 = vld [vmem:[%s347 + $0x10] sm:$0xff]
          %v405 = vld [vmem:[%s347 + $0x18] sm:$0xff]
          %v406 = vld [vmem:[%s347 + $0x20] sm:$0xff]
          %v407 = vld [vmem:[%s347 + $0x28] sm:$0xff]
          %v408 = vld [vmem:[%s347 + $0x30] sm:$0xff]
          %v409 = vld [vmem:[%s347 + $0x38] sm:$0xff]
          %v410 = vld [vmem:[%s361] sm:$0xff]
          %v411 = vld [vmem:[%s361 + $0x8] sm:$0xff]
          %v412 = vld [vmem:[%s361 + $0x10] sm:$0xff]
          %v413 = vld [vmem:[%s361 + $0x18] sm:$0xff]
          %v414 = vld [vmem:[%s361 + $0x20] sm:$0xff]
          %v415 = vld [vmem:[%s361 + $0x28] sm:$0xff]
          %v416 = vld [vmem:[%s361 + $0x30] sm:$0xff]
          %v417 = vld [vmem:[%s361 + $0x38] sm:$0xff]
          %vm418 = vcmask 261120
          %v420 = vsel %vm418, %v398, 0
          %v423 = vsel %vm418, %v399, 0
          %v426 = vsel %vm418, %v400, 0
          %v429 = vsel %vm418, %v401, 0
          %v432 = vsel %vm418, %v402, 0
          %v435 = vsel %vm418, %v403, 0
          %v438 = vsel %vm418, %v404, 0
          %v441 = vsel %vm418, %v405, 0
          %v444 = vsel %vm418, %v406, 0
          %v447 = vsel %vm418, %v407, 0
          %v450 = vsel %vm418, %v408, 0
          %v453 = vsel %vm418, %v409, 0
          %455 = vmatprep.subr.mxu0 0.0
          %456 = vmatpush1.xpose.msra.mxu0 %v432
          %457 = vmatprep.subr.mxu0 0.0
          %458 = vmatpush1.xpose.msra.mxu0 %v435
          %459 = vmatprep.subr.mxu0 0.0
          %460 = vmatpush1.xpose.msra.mxu0 %v438
          %461 = vmatprep.subr.mxu0 0.0
          %462 = vmatpush1.xpose.msra.mxu0 %v441
          %463 = vmatprep.subr.mxu0 0.0
          %464 = vmatpush1.xpose.msra.mxu0 %v444
          %465 = vmatprep.subr.mxu0 0.0
          %466 = vmatpush1.xpose.msra.mxu0 %v447
          %467 = vmatprep.subr.mxu0 0.0
          %468 = vmatpush1.xpose.msra.mxu0 %v450
          %469 = vmatprep.subr.mxu0 0.0
          %470 = vmatpush1.xpose.msra.mxu0 %v453
          %471 = vmatprep.subr.mxu0 0.0
          %472 = vmatpush1.xpose.msra.mxu0 0.0
          %473 = vmatprep.subr.mxu0 0.0
          %474 = vmatpush1.xpose.msra.mxu0 0.0
          %475 = vmatprep.subr.mxu0 0.0
          %476 = vmatpush1.xpose.msra.mxu0 0.0
          %477 = vmatprep.subr.mxu0 0.0
          %478 = vmatpush1.xpose.msra.mxu0 0.0
          %479 = vmatprep.subr.mxu0 0.0
          %480 = vmatpush1.xpose.msra.mxu0 0.0
          %481 = vmatprep.subr.mxu0 0.0
          %482 = vmatpush1.xpose.msra.mxu0 0.0
          %483 = vmatprep.subr.mxu0 0.0
          %484 = vmatpush1.xpose.msra.mxu0 0.0
          %485 = vmatprep.subr.mxu0 0.0
          %486 = vmatpush1.xpose.msra.mxu0 0.0
          %487 = vmatprep.subr.mxu0 0.0
          %488 = vmatpush1.xpose.msra.mxu0 0.0
          %489 = vmatprep.subr.mxu0 0.0
          %490 = vmatpush1.xpose.msra.mxu0 0.0
          %491 = vmatprep.subr.mxu0 0.0
          %492 = vmatpush1.xpose.msra.mxu0 0.0
          %493 = vmatprep.subr.mxu0 0.0
          %494 = vmatpush1.xpose.msra.mxu0 0.0
          %495 = vmatprep.subr.mxu0 0.0
          %496 = vmatpush1.xpose.msra.mxu0 0.0
          %497 = vmatprep.subr.mxu0 0.0
          %498 = vmatpush1.xpose.msra.mxu0 0.0
          %499 = vmatprep.subr.mxu0 0.0
          %500 = vmatpush1.xpose.msra.mxu0 0.0
          %501 = vmatprep.subr.mxu0 0.0
          %502 = vmatpush1.xpose.msra.mxu0 0.0
          %503 = vmatprep.subr.mxu0 0.0
          %504 = vmatpush1.xpose.msra.mxu0 0.0
          %505 = vmatprep.subr.mxu0 0.0
          %506 = vmatpush1.xpose.msra.mxu0 0.0
          %507 = vmatprep.subr.mxu0 0.0
          %508 = vmatpush1.xpose.msra.mxu0 0.0
          %509 = vmatprep.subr.mxu0 0.0
          %510 = vmatpush1.xpose.msra.mxu0 0.0
          %511 = vmatprep.subr.mxu0 0.0
          %512 = vmatpush1.xpose.msra.mxu0 0.0
          %513 = vmatprep.subr.mxu0 0.0
          %514 = vmatpush1.xpose.msra.mxu0 0.0
          %515 = vmatprep.subr.mxu0 0.0
          %516 = vmatpush1.xpose.msra.mxu0 0.0
          %517 = vmatprep.subr.mxu0 0.0
          %518 = vmatpush1.xpose.msra.mxu0 0.0
          %519 = vmatprep.mubr.f32.mxu0 0.0
          %520 = vmatmul.mubr.f32.gmra.mrb[0].mxu0 %v420
          %v521 = vpop.f32.mrb[0].mxu0
          %v522 = vadd.f32 0.0, %v521
          %v523 = vpop.f32.mrb[0].mxu0
          %524 = vmatprep.mubr.f32.mxu0 0.0
          %525 = vmatmul.mubr.f32.gmra.mrb[0].mxu0 %v423
          %v526 = vpop.f32.mrb[0].mxu0
          %v527 = vadd.f32 0.0, %v526
          %v528 = vpop.f32.mrb[0].mxu0
          %529 = vmatprep.mubr.f32.mxu0 0.0
          %530 = vmatmul.mubr.f32.gmra.mrb[0].mxu0 %v426
          %v531 = vpop.f32.mrb[0].mxu0
          %v532 = vadd.f32 0.0, %v531
          %v533 = vpop.f32.mrb[0].mxu0
          %534 = vmatprep.mubr.f32.mxu0 0.0
          %535 = vmatmul.mubr.f32.gmra.mrb[0].mxu0 %v429
          %v536 = vpop.f32.mrb[0].mxu0
          %v537 = vadd.f32 0.0, %v536
          %v538 = vpop.f32.mrb[0].mxu0
          %539 = vdwg.mxu0
          %v540 = vlaneseq
          %v541 = vand.u32 %v540, 127
          %v542 = vstv %s390
          %v543 = vadd.s32 %v542, %v541
          %vm544 = vcmp.lt.s32.totalorder %v543, 96
          %v545 = vld [vmem:[%s371] sm:$0xff]
          %v546 = vld [vmem:[%s371 + $0x8] sm:$0xff]
          %v547 = vld [vmem:[%s371 + $0x10] sm:$0xff]
          %v548 = vld [vmem:[%s371 + $0x18] sm:$0xff]
          %549 = vset.pattern.permute.xlu0 0
          %550 = vperm.xlu0 %549, %v545
          %v551 = vpop.permute.xlu0 %550
          %552 = vset.pattern.permute.xlu0 0
          %553 = vperm.xlu0 %552, %v546
          %v554 = vpop.permute.xlu0 %553
          %555 = vset.pattern.permute.xlu0 0
          %556 = vperm.xlu0 %555, %v547
          %v557 = vpop.permute.xlu0 %556
          %558 = vset.pattern.permute.xlu0 0
          %559 = vperm.xlu0 %558, %v548
          %v560 = vpop.permute.xlu0 %559
          %vm561 = vcmp.le.s32.totalorder %v543, %v551
          %vm562 = vcmp.le.s32.totalorder %v543, %v554
          %vm563 = vcmp.le.s32.totalorder %v543, %v557
          %vm564 = vcmp.le.s32.totalorder %v543, %v560
          %vm565 = vmand %vm544, %vm561
          %vm566 = vmand %vm544, %vm562
          %vm567 = vmand %vm544, %vm563
          %vm568 = vmand %vm544, %vm564
          %v569 = vsel %vm565, %v522, -1e+30
          %v570 = vsel %vm566, %v527, -1e+30
          %v571 = vsel %vm567, %v532, -1e+30
          %v572 = vsel %vm568, %v537, -1e+30
          %v573 = vld [vmem:[#allocation2] sm:$0xff]
          %v574 = vld [vmem:[#allocation2 + $0x8] sm:$0xff]
          %v575 = vld [vmem:[#allocation2 + $0x10] sm:$0xff]
          %v576 = vld [vmem:[#allocation2 + $0x18] sm:$0xff]
          %vm577 = vcmask 523264
          %v578 = vsel %vm577, %v569, -inf
          %579 = vmax.xlane.f32.xlu0 %v578
          %v580 = vpop.xlane.xlu0 %579
          %v581 = vsel %vm577, %v570, -inf
          %582 = vmax.xlane.f32.xlu0 %v581
          %v583 = vpop.xlane.xlu0 %582
          %v584 = vsel %vm577, %v571, -inf
          %585 = vmax.xlane.f32.xlu0 %v584
          %v586 = vpop.xlane.xlu0 %585
          %v587 = vsel %vm577, %v572, -inf
          %588 = vmax.xlane.f32.xlu0 %v587
          %v589 = vpop.xlane.xlu0 %588
          %v590 = vmax.f32 %v573, %v580
          %v591 = vmax.f32 %v574, %v583
          %v592 = vmax.f32 %v575, %v586
          %v593 = vmax.f32 %v576, %v589
          %v594 = vsub.f32 %v573, %v590
          %v595 = vsub.f32 %v574, %v591
          %v596 = vsub.f32 %v575, %v592
          %v597 = vsub.f32 %v576, %v593
          %v598 = vmul.f32 %v594, 1.442695
          %v599 = vpow.pop %v598
          %v600 = vmul.f32 %v595, 1.442695
          %v601 = vpow.pop %v600
          %v602 = vmul.f32 %v596, 1.442695
          %v603 = vpow.pop %v602
          %v604 = vmul.f32 %v597, 1.442695
          %v605 = vpow.pop %v604
          %607 = vset.pattern.permute.xlu0 0
          %608 = vperm.xlu0 %607, %v590
          %v609 = vpop.permute.xlu0 %608
          %612 = vset.pattern.permute.xlu0 0
          %613 = vperm.xlu0 %612, %v591
          %v614 = vpop.permute.xlu0 %613
          %617 = vset.pattern.permute.xlu0 0
          %618 = vperm.xlu0 %617, %v592
          %v619 = vpop.permute.xlu0 %618
          %622 = vset.pattern.permute.xlu0 0
          %623 = vperm.xlu0 %622, %v593
          %v624 = vpop.permute.xlu0 %623
          %v626 = vsub.f32 %v569, %v609
          %v627 = vsub.f32 %v570, %v614
          %v628 = vsub.f32 %v571, %v619
          %v629 = vsub.f32 %v572, %v624
          %v630 = vmul.f32 %v626, 1.442695
          %v631 = vpow.pop %v630
          %v632 = vmul.f32 %v627, 1.442695
          %v633 = vpow.pop %v632
          %v634 = vmul.f32 %v628, 1.442695
          %v635 = vpow.pop %v634
          %v636 = vmul.f32 %v629, 1.442695
          %v637 = vpow.pop %v636
          %v638 = vld [vmem:[#allocation3] sm:$0xff]
          %v639 = vld [vmem:[#allocation3 + $0x8] sm:$0xff]
          %v640 = vld [vmem:[#allocation3 + $0x10] sm:$0xff]
          %v641 = vld [vmem:[#allocation3 + $0x18] sm:$0xff]
          %v642 = vmul.f32 %v599, %v638
          %v643 = vmul.f32 %v601, %v639
          %v644 = vmul.f32 %v603, %v640
          %v645 = vmul.f32 %v605, %v641
          %v646 = vsel %vm577, %v631, 0.0
          %647 = vadd.xlane.f32.xlu0 %v646
          %v648 = vpop.xlane.xlu0 %647
          %v649 = vsel %vm577, %v633, 0.0
          %650 = vadd.xlane.f32.xlu0 %v649
          %v651 = vpop.xlane.xlu0 %650
          %v652 = vsel %vm577, %v635, 0.0
          %653 = vadd.xlane.f32.xlu0 %v652
          %v654 = vpop.xlane.xlu0 %653
          %v655 = vsel %vm577, %v637, 0.0
          %656 = vadd.xlane.f32.xlu0 %v655
          %v657 = vpop.xlane.xlu0 %656
          %v658 = vadd.f32 %v642, %v648
          %v659 = vadd.f32 %v643, %v651
          %v660 = vadd.f32 %v644, %v654
          %v661 = vadd.f32 %v645, %v657
          %vm662 = vcmask 7168
          %663 = vst.msk [vmem:[#allocation3] sm:$0xff] %vm662, %v658
          %664 = vst.msk [vmem:[#allocation3 + $0x8] sm:$0xff] %vm662, %v659
          %665 = vst.msk [vmem:[#allocation3 + $0x10] sm:$0xff] %vm662, %v660
          %666 = vst.msk [vmem:[#allocation3 + $0x18] sm:$0xff] %vm662, %v661
          %v667 = vld [vmem:[#allocation4] sm:$0xff]
          %v668 = vld [vmem:[#allocation4 + $0x8] sm:$0xff]
          %v669 = vld [vmem:[#allocation4 + $0x10] sm:$0xff]
          %v670 = vld [vmem:[#allocation4 + $0x18] sm:$0xff]
          %672 = vset.pattern.permute.xlu0 0
          %673 = vperm.xlu0 %672, %v599
          %v674 = vpop.permute.xlu0 %673
          %677 = vset.pattern.permute.xlu0 0
          %678 = vperm.xlu0 %677, %v601
          %v679 = vpop.permute.xlu0 %678
          %682 = vset.pattern.permute.xlu0 0
          %683 = vperm.xlu0 %682, %v603
          %v684 = vpop.permute.xlu0 %683
          %687 = vset.pattern.permute.xlu0 0
          %688 = vperm.xlu0 %687, %v605
          %v689 = vpop.permute.xlu0 %688
          %v691 = vmul.f32 %v674, %v667
          %v692 = vmul.f32 %v679, %v668
          %v693 = vmul.f32 %v684, %v669
          %v694 = vmul.f32 %v689, %v670
          %v696 = vsel %vm577, %v631, 0
          %v699 = vsel %vm577, %v633, 0
          %v702 = vsel %vm577, %v635, 0
          %v705 = vsel %vm577, %v637, 0
          %707 = vmatprep.subr.mxu0 0.0
          %708 = vmatpush1.msra.mxu0 %v410
          %709 = vmatprep.subr.mxu0 0.0
          %710 = vmatpush1.msra.mxu0 %v411
          %711 = vmatprep.subr.mxu0 0.0
          %712 = vmatpush1.msra.mxu0 %v412
          %713 = vmatprep.subr.mxu0 0.0
          %714 = vmatpush1.msra.mxu0 %v413
          %715 = vmatprep.subr.mxu0 0.0
          %716 = vmatpush1.msra.mxu0 %v414
          %717 = vmatprep.subr.mxu0 0.0
          %718 = vmatpush1.msra.mxu0 %v415
          %719 = vmatprep.subr.mxu0 0.0
          %720 = vmatpush1.msra.mxu0 %v416
          %721 = vmatprep.subr.mxu0 0.0
          %722 = vmatpush1.msra.mxu0 %v417
          %723 = vmatprep.subr.mxu0 0.0
          %724 = vmatpush1.msra.mxu0 0.0
          %725 = vmatprep.subr.mxu0 0.0
          %726 = vmatpush1.msra.mxu0 0.0
          %727 = vmatprep.subr.mxu0 0.0
          %728 = vmatpush1.msra.mxu0 0.0
          %729 = vmatprep.subr.mxu0 0.0
          %730 = vmatpush1.msra.mxu0 0.0
          %731 = vmatprep.subr.mxu0 0.0
          %732 = vmatpush1.msra.mxu0 0.0
          %733 = vmatprep.subr.mxu0 0.0
          %734 = vmatpush1.msra.mxu0 0.0
          %735 = vmatprep.subr.mxu0 0.0
          %736 = vmatpush1.msra.mxu0 0.0
          %737 = vmatprep.subr.mxu0 0.0
          %738 = vmatpush1.msra.mxu0 0.0
          %739 = vmatprep.subr.mxu0 0.0
          %740 = vmatpush1.msra.mxu0 0.0
          %741 = vmatprep.subr.mxu0 0.0
          %742 = vmatpush1.msra.mxu0 0.0
          %743 = vmatprep.subr.mxu0 0.0
          %744 = vmatpush1.msra.mxu0 0.0
          %745 = vmatprep.subr.mxu0 0.0
          %746 = vmatpush1.msra.mxu0 0.0
          %747 = vmatprep.subr.mxu0 0.0
          %748 = vmatpush1.msra.mxu0 0.0
          %749 = vmatprep.subr.mxu0 0.0
          %750 = vmatpush1.msra.mxu0 0.0
          %751 = vmatprep.subr.mxu0 0.0
          %752 = vmatpush1.msra.mxu0 0.0
          %753 = vmatprep.subr.mxu0 0.0
          %754 = vmatpush1.msra.mxu0 0.0
          %755 = vmatprep.subr.mxu0 0.0
          %756 = vmatpush1.msra.mxu0 0.0
          %757 = vmatprep.subr.mxu0 0.0
          %758 = vmatpush1.msra.mxu0 0.0
          %759 = vmatprep.subr.mxu0 0.0
          %760 = vmatpush1.msra.mxu0 0.0
          %761 = vmatprep.subr.mxu0 0.0
          %762 = vmatpush1.msra.mxu0 0.0
          %763 = vmatprep.subr.mxu0 0.0
          %764 = vmatpush1.msra.mxu0 0.0
          %765 = vmatprep.subr.mxu0 0.0
          %766 = vmatpush1.msra.mxu0 0.0
          %767 = vmatprep.subr.mxu0 0.0
          %768 = vmatpush1.msra.mxu0 0.0
          %769 = vmatprep.subr.mxu0 0.0
          %770 = vmatpush1.msra.mxu0 0.0
          %771 = vmatprep.mubr.f32.mxu0 0.0
          %772 = vmatmul.mubr.f32.gmra.mrb[0].mxu0 %v696
          %v773 = vpop.f32.mrb[0].mxu0
          %v774 = vadd.f32 0.0, %v773
          %v775 = vpop.f32.mrb[0].mxu0
          %776 = vmatprep.mubr.f32.mxu0 0.0
          %777 = vmatmul.mubr.f32.gmra.mrb[0].mxu0 %v699
          %v778 = vpop.f32.mrb[0].mxu0
          %v779 = vadd.f32 0.0, %v778
          %v780 = vpop.f32.mrb[0].mxu0
          %781 = vmatprep.mubr.f32.mxu0 0.0
          %782 = vmatmul.mubr.f32.gmra.mrb[0].mxu0 %v702
          %v783 = vpop.f32.mrb[0].mxu0
          %v784 = vadd.f32 0.0, %v783
          %v785 = vpop.f32.mrb[0].mxu0
          %786 = vmatprep.mubr.f32.mxu0 0.0
          %787 = vmatmul.mubr.f32.gmra.mrb[0].mxu0 %v705
          %v788 = vpop.f32.mrb[0].mxu0
          %v789 = vadd.f32 0.0, %v788
          %v790 = vpop.f32.mrb[0].mxu0
          %791 = vdwg.mxu0
          %v792 = vadd.f32 %v691, %v774
          %v793 = vadd.f32 %v692, %v779
          %v794 = vadd.f32 %v693, %v784
          %v795 = vadd.f32 %v694, %v789
          %796 = vst.msk [vmem:[#allocation4] sm:$0xff] %vm418, %v792
          %797 = vst.msk [vmem:[#allocation4 + $0x8] sm:$0xff] %vm418, %v793
          %798 = vst.msk [vmem:[#allocation4 + $0x10] sm:$0xff] %vm418, %v794
          %799 = vst.msk [vmem:[#allocation4 + $0x18] sm:$0xff] %vm418, %v795
          %800 = vst.msk [vmem:[#allocation2] sm:$0xff] %vm662, %v590
          %801 = vst.msk [vmem:[#allocation2 + $0x8] sm:$0xff] %vm662, %v591
          %802 = vst.msk [vmem:[#allocation2 + $0x10] sm:$0xff] %vm662, %v592
          %803 = vst.msk [vmem:[#allocation2 + $0x18] sm:$0xff] %vm662, %v593
        $region44: #{tpu_custom_call.1} parent=35 // pred_fallthru
          _
        %p804 = scmp.eq.s32.totalorder %s32, 1
        // Predicated region
        $region45: #{tpu_custom_call.1} parent=35 // pred_check
          %p805 = pneg %p804
        $region46: #{tpu_custom_call.1} parent=35 // pred_check_branch
          %807 = sbr.rel (%p805) target = $region48
        $region47: #{tpu_custom_call.1} parent=35 // pred_region
          %v808 = vld [vmem:[#allocation4] sm:$0xff]
          %v809 = vld [vmem:[#allocation4 + $0x8] sm:$0xff]
          %v810 = vld [vmem:[#allocation4 + $0x10] sm:$0xff]
          %v811 = vld [vmem:[#allocation4 + $0x18] sm:$0xff]
          %v812 = vld [vmem:[#allocation3] sm:$0xff]
          %v813 = vld [vmem:[#allocation3 + $0x8] sm:$0xff]
          %v814 = vld [vmem:[#allocation3 + $0x10] sm:$0xff]
          %v815 = vld [vmem:[#allocation3 + $0x18] sm:$0xff]
          %v816 = vrcp.pop %v812
          %v817 = vrcp.pop %v813
          %v818 = vrcp.pop %v814
          %v819 = vrcp.pop %v815
          %821 = vset.pattern.permute.xlu0 0
          %822 = vperm.xlu0 %821, %v816
          %v823 = vpop.permute.xlu0 %822
          %826 = vset.pattern.permute.xlu0 0
          %827 = vperm.xlu0 %826, %v817
          %v828 = vpop.permute.xlu0 %827
          %831 = vset.pattern.permute.xlu0 0
          %832 = vperm.xlu0 %831, %v818
          %v833 = vpop.permute.xlu0 %832
          %836 = vset.pattern.permute.xlu0 0
          %837 = vperm.xlu0 %836, %v819
          %v838 = vpop.permute.xlu0 %837
          %v840 = vmul.f32 %v808, %v823
          %v841 = vmul.f32 %v809, %v828
          %v842 = vmul.f32 %v810, %v833
          %v843 = vmul.f32 %v811, %v838
          %vm844 = vcmask 261120
          %845 = vst.msk [vmem:[%s325] sm:$0xff] %vm844, %v840
          %846 = vst.msk [vmem:[%s325 + $0x8] sm:$0xff] %vm844, %v841
          %847 = vst.msk [vmem:[%s325 + $0x10] sm:$0xff] %vm844, %v842
          %848 = vst.msk [vmem:[%s325 + $0x18] sm:$0xff] %vm844, %v843
        $region48: #{tpu_custom_call.1} parent=35 // pred_fallthru
          _
        %s849 = sand.u32 %s170, 1
        %s850 = scalar_lea.sflag [#allocation8], %s849
        %s851 = sand.u32 %s170, 1
        %s852 = smul.addr %s851, 32
        %s853 = scalar_lea.vmem [#allocation7], %s852
        // Predicated region
        $region49: #{tpu_custom_call.1} parent=35 // pred_check
          %p854 = pneg %p180
        $region50: #{tpu_custom_call.1} parent=35 // pred_check_branch
          %856 = sbr.rel (%p854) target = $region52
        $region51: #{tpu_custom_call.1} parent=35 // pred_region
          %s858 = ssub.s32 512, 512
          %859 = vsyncadd %s850, %s858
          %s860 = smul.addr %s31, 4
          %s861 = smul.addr %s30, 16
          %s862 = sadd.s32 %s860, %s861
          %s863 = smul.addr %s862, 128
          %s864 = scalar_lea.hbm %s5, %s863
          %s865 = sshll.u32 %s853, 4
          %s866 = int_to_ptr.vmem [resolvable:$true] %s865
          %871 = dma.vmem_to_hbm [thread:$0]  %s866, 512, %s864, %s850, 128, 128, 8
        $region52: #{tpu_custom_call.1} parent=35 // pred_fallthru
          _
      $region36: #{tpu_custom_call.1} parent=5 // pred_fallthru
        _
      %p872 = scmp.le.s32.totalorder 2, %s20
      // Predicated region
      $region53: #{tpu_custom_call.1} parent=5 // pred_check
        %p873 = pneg %p872
      $region54: #{tpu_custom_call.1} parent=5 // pred_check_branch
        %875 = sbr.rel (%p873) target = $region56
      $region55: #{tpu_custom_call.1} parent=5 // pred_region
        %s876 = ssub.s32 %s20, 2
        // Predicated region
        $region57: #{tpu_custom_call.1} parent=55 // pred_check
          %p877 = pneg %p186
        $region58: #{tpu_custom_call.1} parent=55 // pred_check_branch
          %879 = sbr.rel (%p877) target = $region60
        $region59: #{tpu_custom_call.1} parent=55 // pred_region
          %s880 = sand.u32 %s171, 1
          %s881 = scalar_lea.sflag [#allocation8], %s880
          %s882 = sand.u32 %s171, 1
          %s883 = smul.addr %s882, 32
          %s884 = scalar_lea.vmem [#allocation7], %s883
          %885 = dma.done %s881, 512
        $region60: #{tpu_custom_call.1} parent=55 // pred_fallthru
          _
      $region56: #{tpu_custom_call.1} parent=5 // pred_fallthru
        _
    $region6: #{tpu_custom_call.1} parent=1 // loop_footer
      %s24 = sadd.s32 1, %s20
    $region7: #{tpu_custom_call.1} parent=1 // loop_footer_branch
      %19 = sbr.rel target = $region3
    $region8: #{tpu_custom_call.1} parent=1 // loop_exit
      _
    %886 = vsyncpa [#allocation8], 1
    %s887 = scalar_lea.sflag [#allocation8], 1
    %888 = vsyncpa %s887, 1

</llo_original>
